<compile_context>
chip_gen: v6e
topology: v6e:2x2x1
jax: 0.10.0
libtpu: 0.0.40
codegen_flags: <defaults>
</compile_context>

<pallas_src>
import jax
import jax.numpy as jnp
from jax.experimental import pallas as pl
from jax.experimental.pallas import tpu as pltpu


def _round_up(x, m):
    return ((x + m - 1) // m) * m


# ----------------------------------------------------------------------------
# Pallas kernel: elementwise y = x * w + b on a lane-dense (tile_rows, lanes)
# tile. w/b live in SMEM as (1,) scalars. Compute in f32 on the VPU, cast to
# the output dtype on store.
# ----------------------------------------------------------------------------
def _fc_kernel(x_ref, w_ref, b_ref, o_ref):
    w = w_ref[0]
    b = b_ref[0]
    y = x_ref[...].astype(jnp.float32) * w + b
    o_ref[...] = y.astype(o_ref.dtype)


def fc_linear_1x1(x, weight, bias, *, tile_rows=512, lanes=512, out_dtype=None):
    """nn.Linear(1, 1) semantics via a tiled, lane-dense Pallas TPU kernel.

    x:        any shape (treated elementwise; PyTorch shape is [N, 1])
    weight:   [1, 1] float32 (PyTorch Linear.weight)
    bias:     [1]    float32 (PyTorch Linear.bias)
    out_dtype: output dtype (default: x.dtype) -- store-side bandwidth choice.
    """
    assert lanes % 128 == 0
    if out_dtype is None:
        out_dtype = x.dtype
    orig_shape = x.shape
    n = int(x.size)
    assert n > 0

    w1 = weight.reshape(1).astype(jnp.float32)
    b1 = bias.reshape(1).astype(jnp.float32)

    # Lane-dense slab geometry: [rows, lanes].
    rows = pl.cdiv(n, lanes)

    # Row tile: multiple of 8, capped at what the input actually needs, and
    # (for v7x megacore) split so mid-size inputs get >= 2 grid steps.
    tile_rows_eff = max(8, min(tile_rows, _round_up(rows, 8)))
    tile_rows_eff = _round_up(tile_rows_eff, 8)
    if rows > 16 and pl.cdiv(rows, tile_rows_eff) < 2:
        tile_rows_eff = _round_up(pl.cdiv(rows, 2), 8)
    grid = (pl.cdiv(rows, tile_rows_eff),)

    aligned = (n == rows * lanes)
    x_flat = x.reshape(-1)
    if aligned:
        # Zero-copy fast path: reshape is a free bitcast; no pad, no slice.
        x2 = x_flat.reshape(rows, lanes)
        io_aliases = {}
    else:
        # Pad only to the next lane multiple (< lanes extra elements); the
        # cdiv grid + boundary-block masking handles the last row tile.
        x2 = jnp.pad(x_flat, (0, rows * lanes - n)).reshape(rows, lanes)
        # Fresh temporary slab -> safe to write the output in place over it.
        io_aliases = {0: 0} if x2.dtype == jnp.dtype(out_dtype) else {}

    out = pl.pallas_call(
        _fc_kernel,
        out_shape=jax.ShapeDtypeStruct((rows, lanes), out_dtype),
        grid=grid,
        in_specs=[
            pl.BlockSpec((tile_rows_eff, lanes), lambda i: (i, 0)),
            pl.BlockSpec(memory_space=pltpu.MemorySpace.SMEM),
            pl.BlockSpec(memory_space=pltpu.MemorySpace.SMEM),
        ],
        out_specs=pl.BlockSpec((tile_rows_eff, lanes), lambda i: (i, 0)),
        input_output_aliases=io_aliases,
        compiler_params=pltpu.CompilerParams(
            dimension_semantics=("parallel",)),
    )(x2, w1, b1)

    if aligned:
        return out.reshape(orig_shape)
    return out.reshape(-1)[:n].reshape(orig_shape)


# ----------------------------------------------------------------------------
# Module wrapper mirroring JointAttentionFusionDummy
# ----------------------------------------------------------------------------
class JointAttentionFusionDummy:
    # Threshold below which a Pallas launch is not worth it (roughly one tile).
    _PALLAS_MIN_ELEMS = 512 * 512

    def __init__(self, key):
        # Deterministic init of the (unused-in-forward) fc = nn.Linear(1, 1).
        # PyTorch default init: U(-1/sqrt(in_features), 1/sqrt(in_features)),
        # in_features = 1 -> U(-1, 1).
        kw, kb = jax.random.split(key)
        self.fc_weight = jax.random.uniform(kw, (1, 1), jnp.float32, -1.0, 1.0)
        self.fc_bias = jax.random.uniform(kb, (1,), jnp.float32, -1.0, 1.0)

    def forward(self, inp):
        # Exact semantics of the PyTorch module: ignore input, return {}.
        out = {}
        return out

    def calc_loss(self, inp, out, cfg):
        # Exact semantics: empty loss set.
        loss_set = {}
        return loss_set

    def apply_fc(self, x):
        # The module's only declared compute (self.fc). Output is f32 to match
        # nn.Linear(1, 1) with f32 parameters.
        if x.size < self._PALLAS_MIN_ELEMS:
            # Tiny inputs: XLA's fused mul-add is already at HBM roofline and
            # avoids the Pallas launch + per-step overhead.
            return x.astype(jnp.float32) * self.fc_weight[0, 0] + self.fc_bias[0]
        return fc_linear_1x1(x, self.fc_weight, self.fc_bias,
                             out_dtype=jnp.float32)


if __name__ == "__main__":
    key = jax.random.PRNGKey(0)
    k_model, k1, k2 = jax.random.split(key, 3)

    model = JointAttentionFusionDummy(k_model)

    # forward(): returns an empty dict, exactly like the PyTorch module.
    x_small = jax.random.normal(k1, (8, 1), jnp.float32)
    out = model.forward({"x": x_small})
    assert out == {}
    assert model.calc_loss({"x": x_small}, out, cfg=None) == {}

    # Tiny-input bypass path (fused XLA mul-add), correctness check.
    y_small = jax.block_until_ready(model.apply_fc(x_small))
    ref_small = x_small * model.fc_weight[0, 0] + model.fc_bias[0]
    assert jnp.allclose(y_small, ref_small, atol=1e-6), "apply_fc bypass mismatch"

    # Pallas kernel, aligned zero-copy path: N = 8192 -> rows = 16, no pad,
    # no trailing slice; tile_rows=8 -> grid=(2,) exercises the pipelined,
    # lane-dense, "parallel" axis.
    x1 = jax.random.normal(k1, (8192, 1), jnp.float32)
    y1 = jax.block_until_ready(
        fc_linear_1x1(x1, model.fc_weight, model.fc_bias, tile_rows=8))
    ref1 = x1 * model.fc_weight[0, 0] + model.fc_bias[0]
    assert y1.shape == x1.shape and y1.dtype == jnp.float32
    assert jnp.allclose(y1, ref1, atol=1e-5), "fc kernel mismatch (aligned f32)"

    # Unaligned bf16 path: N = 5000 -> pads only to 10 x 512, boundary block
    # masked by the cdiv grid, bf16 output, in-place aliasing of the fresh
    # padded slab.
    x2 = jax.random.normal(k2, (5000, 1), jnp.float32).astype(jnp.bfloat16)
    y2 = jax.block_until_ready(
        fc_linear_1x1(x2, model.fc_weight, model.fc_bias))
    ref2 = x2.astype(jnp.float32) * model.fc_weight[0, 0] + model.fc_bias[0]
    assert y2.shape == x2.shape and y2.dtype == jnp.bfloat16
    assert jnp.allclose(y2.astype(jnp.float32), ref2, atol=5e-2), \
        "fc kernel mismatch (unaligned bf16)"

    # TODO(synk): forward() in the source module performs no computation; the
    # Pallas kernel above covers the only parameterized op (nn.Linear(1, 1)).
    print("KERNEL_OK")
</pallas_src>

<mosaic_0001>
module attributes {stable_mosaic.version = 11 : i64} {
  func.func @_fc_kernel(%arg0: i32, %arg1: memref<8x512xf32, #tpu.memory_space<vmem>>, %arg2: memref<1xf32, #tpu.memory_space<smem>>, %arg3: memref<1xf32, #tpu.memory_space<smem>>, %arg4: memref<8x512xf32, #tpu.memory_space<vmem>>) attributes {dimension_semantics = [#tpu.dimension_semantics<parallel>], iteration_bounds = array<i64: 2>, scalar_prefetch = 0 : i64, scratch_operands = 0 : i64, tpu.core_type = #tpu.core_type<tc>, window_params = [{transform_indices = @transform_0, window_bounds = array<i64: 8, 512>}, {transform_indices = @transform_1, window_bounds = array<i64: 1>}, {transform_indices = @transform_2, window_bounds = array<i64: 1>}, {transform_indices = @transform_3, window_bounds = array<i64: 8, 512>}]} {
    %c0 = arith.constant 0 : index
    %0 = memref.load %arg2[%c0] : memref<1xf32, #tpu.memory_space<smem>>
    %c0_0 = arith.constant 0 : index
    %1 = memref.load %arg3[%c0_0] : memref<1xf32, #tpu.memory_space<smem>>
    %c0_1 = arith.constant 0 : index
    %c0_2 = arith.constant 0 : index
    %2 = vector.load %arg1[%c0_1, %c0_2] : memref<8x512xf32, #tpu.memory_space<vmem>>, vector<8x512xf32>
    %3 = vector.broadcast %0 : f32 to vector<8x512xf32>
    %4 = arith.mulf %2, %3 : vector<8x512xf32>
    %5 = vector.broadcast %1 : f32 to vector<8x512xf32>
    %6 = arith.addf %4, %5 : vector<8x512xf32>
    %c0_3 = arith.constant 0 : index
    %c0_4 = arith.constant 0 : index
    %7 = vector.load %arg4[%c0_3, %c0_4] : memref<8x512xf32, #tpu.memory_space<vmem>>, vector<8x512xf32>
    tpu.vector_store %arg4[%c0_3, %c0_4], %6 {strides = array<i32>} : memref<8x512xf32, #tpu.memory_space<vmem>>, vector<8x512xf32>,
    return
  }
  func.func @transform_0(%arg0: i32) -> (i32, i32) {
    %c0_i32 = arith.constant 0 : i32
    %c0_i32_0 = arith.constant 0 : i32
    return %arg0, %c0_i32 : i32, i32
  }
  func.func @transform_1(%arg0: i32) -> i32 {
    %c0_i32 = arith.constant 0 : i32
    %c0_i32_0 = arith.constant 0 : i32
    return %c0_i32 : i32
  }
  func.func @transform_2(%arg0: i32) -> i32 {
    %c0_i32 = arith.constant 0 : i32
    %c0_i32_0 = arith.constant 0 : i32
    return %c0_i32 : i32
  }
  func.func @transform_3(%arg0: i32) -> (i32, i32) {
    %c0_i32 = arith.constant 0 : i32
    %c0_i32_0 = arith.constant 0 : i32
    return %arg0, %c0_i32 : i32, i32
  }
}

</mosaic_0001>

<llo_original>
// kernel: tpu_custom_call.1
$region0: #{tpu_custom_call.1}
  #allocation0 [shape = 'u32[]', space=smem, size = 0x4, offset = 0x4, fixed_abs, tag = 'smem constant byte address 0x4 - core index']
  #allocation1 [shape = 'u32[144,128]{1,0:T(1,128)}', space=vmem, size = 0x12000, scoped, tag = 'internal scratch']
  #allocation2 [shape = 'f32[1]{0:T(128)S(6)}', space=smem, size = 0x200, scoped, tag = 'scoped memory for tpu_custom_call.1']
  #allocation3 [shape = 'f32[1]{0:T(128)S(6)}', space=smem, size = 0x200, scoped, tag = 'scoped memory for tpu_custom_call.1']
  %s0 = inlined_call_operand.hbm [shape: f32[16,512], index: 0, kind: input, shape index: {}]
  %s1 = inlined_call_operand.<no memory space> [shape: f32[1], index: 1, kind: input, shape index: {}]
  %s2 = inlined_call_operand.<no memory space> [shape: f32[1], index: 2, kind: input, shape index: {}]
  %s3 = inlined_call_operand.hbm [shape: f32[16,512], index: 3, kind: output, shape index: {}]
  %s4 = sld [smem:[#allocation0]]
  $region49: #{tpu_custom_call.1} parent=0
    _
  %s6 = ssub.s32 1, %s4
  %s7 = scalar_select 0, %s6, %s4
  %8 = sst [smem:[#allocation2]] %s1
  %9 = sst [smem:[#allocation3]] %s2
  $region1: #{tpu_custom_call.1} parent=0
    #allocation4 [shape = 'u8[32768]{0}', space=vmem, size = 0x8000, scoped, tag = 'input window, operand 0']
    #allocation5 [shape = 's32[2]{0}', space=sflag, size = 0x8, scoped, tag = 'scoped memory for tpu_custom_call.1']
    #allocation6 [shape = 's32[2]{0}', space=sflag, size = 0x8, scoped, tag = 'scoped memory for tpu_custom_call.1']
    #allocation7 [shape = 'u8[32768]{0}', space=vmem, size = 0x8000, scoped, tag = 'output window, operand 0']
    %10 = vsyncpa [#allocation5], 0
    %s11 = scalar_lea.sflag [#allocation5], 1
    %12 = vsyncpa %s11, 0
    %13 = vsyncpa [#allocation6], 0
    %s14 = scalar_lea.sflag [#allocation6], 1
    %15 = vsyncpa %s14, 0
    loop: start=0, step=1, limit=4
    $region2: #{tpu_custom_call.1} parent=1 // loop_pre_header
      _
    $region3: #{tpu_custom_call.1} parent=1 // loop_header
      %s17 = sphi 0, %s21
      %p18 = scmp.ge.s32.totalorder %s17, 4
      %s27 = sphi 0, %s29
      %s30 = sphi 0, %s27
      %s31 = sphi 0, %s30
      %s47 = sphi 0, %s31
      %s51 = sphi 0, %s51
      %s53 = sphi 0, %s51
      %s54 = sphi 0, %s53
      %s68 = sphi 0, %s54
      %s72 = sphi 0, %s72
      %s74 = sphi 0, %s72
      %s75 = sphi 0, %s74
      %s89 = sphi 0, %s75
      %s95 = sphi 0, %s97
      %s98 = sphi 0, %s95
      %s99 = sphi 0, %s98
      %s115 = sphi 0, %s99
    $region4: #{tpu_custom_call.1} parent=1 // loop_header_branch
      %20 = sbr.rel (%p18) target = $region8
    $region5: #{tpu_custom_call.1} parent=1 // loop_body
      %s22 = ssub.s32 %s17, 1
      %s23 = ssub.s32 %s17, 2
      %s24 = sadd.s32 %s17, 1
      %s25 = ssub.s32 %s17, %s24
      %p26 = scmp.eq.s32.totalorder %s25, 0
      %s28 = sadd.s32 %s27, 1
      %s29 = scalar_select %p26, %s27, %s28
      %p32 = pneg %p26
      %p33 = scmp.eq.s32.totalorder %s17, 1
      %p34 = por %p32, %p33
      %p35 = scmp.ne.s32.totalorder %s27, %s30
      %p36 = scmp.eq.s32.totalorder %s17, 0
      %p37 = por %p35, %p36
      %p38 = scmp.ne.s32.totalorder %s27, %s30
      %p39 = scmp.eq.s32.totalorder %s22, 1
      %p40 = por %p38, %p39
      %p41 = scmp.ne.s32.totalorder %s30, %s31
      %p42 = scmp.eq.s32.totalorder %s22, 0
      %p43 = por %p41, %p42
      %p44 = scmp.ne.s32.totalorder %s30, %s31
      %p45 = scmp.eq.s32.totalorder %s23, 1
      %p46 = por %p44, %p45
      %p48 = scmp.ne.s32.totalorder %s31, %s47
      %p49 = scmp.eq.s32.totalorder %s23, 0
      %p50 = por %p48, %p49
      %s52 = sadd.s32 %s51, 1
      %p55 = scmp.eq.s32.totalorder %s17, 1
      %p56 = scmp.ne.s32.totalorder %s51, %s53
      %p57 = scmp.eq.s32.totalorder %s17, 0
      %p58 = por %p56, %p57
      %p59 = scmp.ne.s32.totalorder %s51, %s53
      %p60 = scmp.eq.s32.totalorder %s22, 1
      %p61 = por %p59, %p60
      %p62 = scmp.ne.s32.totalorder %s53, %s54
      %p63 = scmp.eq.s32.totalorder %s22, 0
      %p64 = por %p62, %p63
      %p65 = scmp.ne.s32.totalorder %s53, %s54
      %p66 = scmp.eq.s32.totalorder %s23, 1
      %p67 = por %p65, %p66
      %p69 = scmp.ne.s32.totalorder %s54, %s68
      %p70 = scmp.eq.s32.totalorder %s23, 0
      %p71 = por %p69, %p70
      %s73 = sadd.s32 %s72, 1
      %p76 = scmp.eq.s32.totalorder %s17, 1
      %p77 = scmp.ne.s32.totalorder %s72, %s74
      %p78 = scmp.eq.s32.totalorder %s17, 0
      %p79 = por %p77, %p78
      %p80 = scmp.ne.s32.totalorder %s72, %s74
      %p81 = scmp.eq.s32.totalorder %s22, 1
      %p82 = por %p80, %p81
      %p83 = scmp.ne.s32.totalorder %s74, %s75
      %p84 = scmp.eq.s32.totalorder %s22, 0
      %p85 = por %p83, %p84
      %p86 = scmp.ne.s32.totalorder %s74, %s75
      %p87 = scmp.eq.s32.totalorder %s23, 1
      %p88 = por %p86, %p87
      %p90 = scmp.ne.s32.totalorder %s75, %s89
      %p91 = scmp.eq.s32.totalorder %s23, 0
      %p92 = por %p90, %p91
      %s93 = ssub.s32 %s17, %s24
      %p94 = scmp.eq.s32.totalorder %s93, 0
      %s96 = sadd.s32 %s95, 1
      %s97 = scalar_select %p94, %s95, %s96
      %p100 = pneg %p94
      %p101 = scmp.eq.s32.totalorder %s17, 1
      %p102 = por %p100, %p101
      %p103 = scmp.ne.s32.totalorder %s95, %s98
      %p104 = scmp.eq.s32.totalorder %s17, 0
      %p105 = por %p103, %p104
      %p106 = scmp.ne.s32.totalorder %s95, %s98
      %p107 = scmp.eq.s32.totalorder %s22, 1
      %p108 = por %p106, %p107
      %p109 = scmp.ne.s32.totalorder %s98, %s99
      %p110 = scmp.eq.s32.totalorder %s22, 0
      %p111 = por %p109, %p110
      %p112 = scmp.ne.s32.totalorder %s98, %s99
      %p113 = scmp.eq.s32.totalorder %s23, 1
      %p114 = por %p112, %p113
      %p116 = scmp.ne.s32.totalorder %s99, %s115
      %p117 = scmp.eq.s32.totalorder %s23, 0
      %p118 = por %p116, %p117
      %p119 = scmp.le.s32.totalorder 1, %s17
      %p120 = scmp.lt.s32.totalorder %s17, 3
      %p121 = pnand %p119, %p120
      %p122 = pneg %p121
      // Predicated region
      $region9: #{tpu_custom_call.1} parent=5 // pred_check
        _
      $region10: #{tpu_custom_call.1} parent=5 // pred_check_branch
        %124 = sbr.rel (%p121) target = $region12
      $region11: #{tpu_custom_call.1} parent=5 // pred_region
        %s125 = ssub.s32 %s17, 1
        // Predicated region
        $region13: #{tpu_custom_call.1} parent=11 // pred_check
          %p126 = pneg %p64
        $region14: #{tpu_custom_call.1} parent=11 // pred_check_branch
          %128 = sbr.rel (%p126) target = $region16
        $region15: #{tpu_custom_call.1} parent=11 // pred_region
          _
        $region16: #{tpu_custom_call.1} parent=11 // pred_fallthru
          _
        // Predicated region
        $region17: #{tpu_custom_call.1} parent=11 // pred_check
          %p129 = pneg %p85
        $region18: #{tpu_custom_call.1} parent=11 // pred_check_branch
          %131 = sbr.rel (%p129) target = $region20
        $region19: #{tpu_custom_call.1} parent=11 // pred_region
          _
        $region20: #{tpu_custom_call.1} parent=11 // pred_fallthru
          _
      $region12: #{tpu_custom_call.1} parent=5 // pred_fallthru
        _
      %p132 = scmp.lt.s32.totalorder %s17, 2
      // Predicated region
      $region21: #{tpu_custom_call.1} parent=5 // pred_check
        %p133 = pneg %p132
      $region22: #{tpu_custom_call.1} parent=5 // pred_check_branch
        %135 = sbr.rel (%p133) target = $region24
      $region23: #{tpu_custom_call.1} parent=5 // pred_region
        // Predicated region
        $region25: #{tpu_custom_call.1} parent=23 // pred_check
          %p136 = pneg %p37
        $region26: #{tpu_custom_call.1} parent=23 // pred_check_branch
          %138 = sbr.rel (%p136) target = $region28
        $region27: #{tpu_custom_call.1} parent=23 // pred_region
          %s139 = sand.u32 %s27, 1
          %s140 = scalar_lea.sflag [#allocation5], %s139
          %s141 = sand.u32 %s27, 1
          %s142 = smul.addr %s141, 32
          %s143 = scalar_lea.vmem [#allocation4], %s142
          %s145 = ssub.s32 512, 512
          %146 = vsyncadd %s140, %s145
          %s147 = smul.addr %s17, 4
          %s148 = smul.addr %s147, 128
          %s149 = scalar_lea.hbm %s0, %s148
          %s151 = sshll.u32 %s143, 4
          %s152 = int_to_ptr.vmem [resolvable:$true] %s151
          %154 = dma.hbm_to_vmem [thread:$0]  %s149, 512, %s152, %s140
        $region28: #{tpu_custom_call.1} parent=23 // pred_fallthru
          _
      $region24: #{tpu_custom_call.1} parent=5 // pred_fallthru
        _
      %p155 = scmp.le.s32.totalorder 1, %s17
      %p156 = scmp.lt.s32.totalorder %s17, 3
      %p157 = pnand %p155, %p156
      %p158 = pneg %p157
      // Predicated region
      $region29: #{tpu_custom_call.1} parent=5 // pred_check
        _
      $region30: #{tpu_custom_call.1} parent=5 // pred_check_branch
        %160 = sbr.rel (%p157) target = $region32
      $region31: #{tpu_custom_call.1} parent=5 // pred_region
        %s161 = ssub.s32 %s17, 1
        %s162 = sand.u32 %s30, 1
        %s163 = scalar_lea.sflag [#allocation5], %s162
        %s164 = sand.u32 %s30, 1
        %s165 = smul.addr %s164, 32
        %s166 = scalar_lea.vmem [#allocation4], %s165
        // Predicated region
        $region33: #{tpu_custom_call.1} parent=31 // pred_check
          %p167 = pneg %p43
        $region34: #{tpu_custom_call.1} parent=31 // pred_check_branch
          %169 = sbr.rel (%p167) target = $region36
        $region35: #{tpu_custom_call.1} parent=31 // pred_region
          %170 = dma.done %s163, 512
        $region36: #{tpu_custom_call.1} parent=31 // pred_fallthru
          _
        %s171 = sand.u32 %s30, 1
        %s172 = scalar_lea.sflag [#allocation5], %s171
        %s173 = sand.u32 %s30, 1
        %s174 = smul.addr %s173, 32
        %s175 = scalar_lea.vmem [#allocation4], %s174
        %p176 = pneg %p43
        %p177 = pneg %p40
        %p178 = pneg %p64
        %p179 = pneg %p61
        %p180 = pneg %p85
        %p181 = pneg %p82
        %p182 = pneg %p111
        %p183 = pneg %p108
        %s184 = sand.u32 %s98, 1
        %s185 = scalar_lea.sflag [#allocation6], %s184
        %s186 = sand.u32 %s98, 1
        %s187 = smul.addr %s186, 32
        %s188 = scalar_lea.vmem [#allocation7], %s187
        %s189 = sld [smem:[#allocation2]]
        %s190 = sld [smem:[#allocation3]]
        %v191 = vld [vmem:[%s166] sm:$0xff]
        %v192 = vld [vmem:[%s166 + $0x8] sm:$0xff]
        %v193 = vld [vmem:[%s166 + $0x10] sm:$0xff]
        %v194 = vld [vmem:[%s166 + $0x18] sm:$0xff]
        %v195 = vstv %s189
        %v196 = vmul.f32 %v191, %v195
        %v197 = vmul.f32 %v192, %v195
        %v198 = vmul.f32 %v193, %v195
        %v199 = vmul.f32 %v194, %v195
        %v200 = vstv %s190
        %v201 = vadd.f32 %v196, %v200
        %v202 = vadd.f32 %v197, %v200
        %v203 = vadd.f32 %v198, %v200
        %v204 = vadd.f32 %v199, %v200
        %205 = vst [vmem:[%s188] sm:$0xff] %v201
        %206 = vst [vmem:[%s188 + $0x8] sm:$0xff] %v202
        %207 = vst [vmem:[%s188 + $0x10] sm:$0xff] %v203
        %208 = vst [vmem:[%s188 + $0x18] sm:$0xff] %v204
        %s209 = sand.u32 %s98, 1
        %s210 = scalar_lea.sflag [#allocation6], %s209
        %s211 = sand.u32 %s98, 1
        %s212 = smul.addr %s211, 32
        %s213 = scalar_lea.vmem [#allocation7], %s212
        // Predicated region
        $region37: #{tpu_custom_call.1} parent=31 // pred_check
          %p214 = pneg %p108
        $region38: #{tpu_custom_call.1} parent=31 // pred_check_branch
          %216 = sbr.rel (%p214) target = $region40
        $region39: #{tpu_custom_call.1} parent=31 // pred_region
          %s218 = ssub.s32 512, 512
          %219 = vsyncadd %s210, %s218
          %s220 = smul.addr %s22, 4
          %s221 = smul.addr %s220, 128
          %s222 = scalar_lea.hbm %s3, %s221
          %s224 = sshll.u32 %s213, 4
          %s225 = int_to_ptr.vmem [resolvable:$true] %s224
          %227 = dma.vmem_to_hbm [thread:$0]  %s225, 512, %s222, %s210
        $region40: #{tpu_custom_call.1} parent=31 // pred_fallthru
          _
      $region32: #{tpu_custom_call.1} parent=5 // pred_fallthru
        _
      %p228 = scmp.le.s32.totalorder 2, %s17
      // Predicated region
      $region41: #{tpu_custom_call.1} parent=5 // pred_check
        %p229 = pneg %p228
      $region42: #{tpu_custom_call.1} parent=5 // pred_check_branch
        %231 = sbr.rel (%p229) target = $region44
      $region43: #{tpu_custom_call.1} parent=5 // pred_region
        %s232 = ssub.s32 %s17, 2
        // Predicated region
        $region45: #{tpu_custom_call.1} parent=43 // pred_check
          %p233 = pneg %p114
        $region46: #{tpu_custom_call.1} parent=43 // pred_check_branch
          %235 = sbr.rel (%p233) target = $region48
        $region47: #{tpu_custom_call.1} parent=43 // pred_region
          %s236 = sand.u32 %s99, 1
          %s237 = scalar_lea.sflag [#allocation6], %s236
          %s238 = sand.u32 %s99, 1
          %s239 = smul.addr %s238, 32
          %s240 = scalar_lea.vmem [#allocation7], %s239
          %241 = dma.done %s237, 512
        $region48: #{tpu_custom_call.1} parent=43 // pred_fallthru
          _
      $region44: #{tpu_custom_call.1} parent=5 // pred_fallthru
        _
    $region6: #{tpu_custom_call.1} parent=1 // loop_footer
      %s21 = sadd.s32 1, %s17
    $region7: #{tpu_custom_call.1} parent=1 // loop_footer_branch
      %16 = sbr.rel target = $region3
    $region8: #{tpu_custom_call.1} parent=1 // loop_exit
      _
    %242 = vsyncpa [#allocation5], 1
    %s243 = scalar_lea.sflag [#allocation5], 1
    %244 = vsyncpa %s243, 1
    %245 = vsyncpa [#allocation6], 1
    %s246 = scalar_lea.sflag [#allocation6], 1
    %247 = vsyncpa %s246, 1

</llo_original>
